<compile_context>
chip_gen: v7x
topology: tpu7x:2x2x1
jax: 0.10.0
libtpu: 0.0.40
codegen_flags: <defaults>
</compile_context>

<pallas_src>
import functools

import jax
import jax.numpy as jnp
from jax.experimental import pallas as pl
from jax.experimental.pallas import tpu as pltpu


def _fader_kernel(x_ref, o_ref, *, gain):
    # x_ref / o_ref: (TB, L) lane-dense tile in VMEM.
    g = jnp.asarray(gain, dtype=x_ref.dtype)
    o_ref[...] = x_ref[...] * g


def fader(x, gain):
    """Pallas TPU implementation of Fader.forward: x * gain (gain static scalar)."""
    orig_shape = x.shape

    # Flatten to a lane-dense 2D view: rows = prod(leading dims), cols = H*W.
    if x.ndim >= 2:
        L = orig_shape[-1] * orig_shape[-2]
        M = 1
        for d in orig_shape[:-2]:
            M *= d
    else:
        L = orig_shape[-1] if x.ndim == 1 else 1
        M = 1
    x2 = x.reshape(M, L)

    itemsize = jnp.dtype(x.dtype).itemsize
    max_block_bytes = 4 * 1024 * 1024  # keep well under v7x VMEM with 2x double-buffering
    tb = max(1, min(M, max_block_bytes // max(1, L * itemsize)))
    if tb >= 8:
        tb = (tb // 8) * 8  # clean sublane multiple

    # Block shape must have last two dims divisible by (8, 128) OR equal the
    # full array dims; otherwise fall back to a single full-array block.
    if (tb != M or L % 128 != 0) and (tb % 8 != 0 or L % 128 != 0):
        tb = M  # single block covering whole array (small-input fallback)

    grid = (pl.cdiv(M, tb),)

    out2 = pl.pallas_call(
        functools.partial(_fader_kernel, gain=gain),
        out_shape=jax.ShapeDtypeStruct((M, L), x.dtype),
        grid_spec=pltpu.PrefetchScalarGridSpec(
            num_scalar_prefetch=0,
            grid=grid,
            in_specs=[pl.BlockSpec((tb, L), lambda i: (i, 0))],
            out_specs=pl.BlockSpec((tb, L), lambda i: (i, 0)),
        ),
        compiler_params=pltpu.CompilerParams(
            dimension_semantics=("parallel",),
        ),
    )(x2)

    return out2.reshape(orig_shape)


if __name__ == "__main__":
    key = jax.random.PRNGKey(0)
    # Small NCHW input consistent with the module's usage.
    x = jax.random.normal(key, (2, 4, 16, 16), dtype=jnp.float32)
    gain = 0.5  # fixed at "module init", mirroring functools.partial(fader, gain=gain)

    out = fader(x, gain)
    out = jax.block_until_ready(out)

    ref = x * gain
    assert out.shape == ref.shape and out.dtype == ref.dtype
    assert jnp.allclose(out, ref, atol=0.0, rtol=0.0), "mismatch vs reference x * gain"

    print("KERNEL_OK")
</pallas_src>

<mosaic_0001>
module attributes {stable_mosaic.version = 11 : i64} {
  func.func @_fader_kernel(%arg0: i32, %arg1: memref<8x256xf32, #tpu.memory_space<vmem>>, %arg2: memref<8x256xf32, #tpu.memory_space<vmem>>) attributes {dimension_semantics = [#tpu.dimension_semantics<parallel>], iteration_bounds = array<i64: 1>, scalar_prefetch = 0 : i64, scratch_operands = 0 : i64, tpu.core_type = #tpu.core_type<tc>, window_params = [{transform_indices = @transform_0, window_bounds = array<i64: 8, 256>}, {transform_indices = @transform_1, window_bounds = array<i64: 8, 256>}]} {
    %c0 = arith.constant 0 : index
    %c0_0 = arith.constant 0 : index
    %0 = vector.load %arg1[%c0, %c0_0] : memref<8x256xf32, #tpu.memory_space<vmem>>, vector<8x256xf32>
    %cst = arith.constant 5.000000e-01 : f32
    %1 = vector.broadcast %cst : f32 to vector<8x256xf32>
    %2 = arith.mulf %0, %1 : vector<8x256xf32>
    %c0_1 = arith.constant 0 : index
    %c0_2 = arith.constant 0 : index
    %3 = vector.load %arg2[%c0_1, %c0_2] : memref<8x256xf32, #tpu.memory_space<vmem>>, vector<8x256xf32>
    tpu.vector_store %arg2[%c0_1, %c0_2], %2 {strides = array<i32>} : memref<8x256xf32, #tpu.memory_space<vmem>>, vector<8x256xf32>,
    return
  }
  func.func @transform_0(%arg0: i32) -> (i32, i32) {
    %c0_i32 = arith.constant 0 : i32
    %c0_i32_0 = arith.constant 0 : i32
    return %arg0, %c0_i32 : i32, i32
  }
  func.func @transform_1(%arg0: i32) -> (i32, i32) {
    %c0_i32 = arith.constant 0 : i32
    %c0_i32_0 = arith.constant 0 : i32
    return %arg0, %c0_i32 : i32, i32
  }
}

</mosaic_0001>

<llo_original>
// kernel: tpu_custom_call.1
$region0: #{tpu_custom_call.1}
  #allocation0 [shape = 'u32[]', space=smem, size = 0x4, offset = 0x4, fixed_abs, tag = 'smem constant byte address 0x4 - core index']
  #allocation1 [shape = 'u32[144,128]{1,0:T(1,128)}', space=vmem, size = 0x12000, scoped, tag = 'internal scratch']
  %s0 = inlined_call_operand.hbm [shape: f32[8,256], index: 0, kind: input, shape index: {}]
  %s1 = inlined_call_operand.hbm [shape: f32[8,256], index: 1, kind: output, shape index: {}]
  %s2 = sld [smem:[#allocation0]]
  $region18: #{tpu_custom_call.1} parent=0
    _
  %s4 = ssub.s32 1, %s2
  %s5 = scalar_select 0, %s4, %s2
  $region1: #{tpu_custom_call.1} parent=0
    #allocation2 [shape = 'u8[8192]{0}', space=vmem, size = 0x2000, scoped, tag = 'input window, operand 0, single buffered']
    #allocation3 [shape = 's32[1]{0}', space=sflag, size = 0x4, scoped, tag = 'scoped memory for tpu_custom_call.1']
    #allocation4 [shape = 's32[1]{0}', space=sflag, size = 0x4, scoped, tag = 'scoped memory for tpu_custom_call.1']
    #allocation5 [shape = 'u8[8192]{0}', space=vmem, size = 0x2000, scoped, tag = 'output window, operand 0, single buffered']
    %6 = vsyncpa [#allocation3], 0
    %7 = vsyncpa [#allocation4], 0
    // Predicated region
    $region2: #{tpu_custom_call.1} parent=1 // pred_check
      _
    $region3: #{tpu_custom_call.1} parent=1 // pred_check_branch
      %9 = sbr.rel (0) target = $region5
    $region4: #{tpu_custom_call.1} parent=1 // pred_region
      %s11 = ssub.s32 256, 256
      %12 = vsyncadd [#allocation3], %s11
      %s14 = sshll.u32 [#allocation2], 4
      %s15 = int_to_ptr.vmem [resolvable:$true] %s14
      %17 = dma.hbm_to_vmem [thread:$0]  %s0, 256, %s15, [#allocation3]
    $region5: #{tpu_custom_call.1} parent=1 // pred_fallthru
      _
    // Predicated region
    $region6: #{tpu_custom_call.1} parent=1 // pred_check
      _
    $region7: #{tpu_custom_call.1} parent=1 // pred_check_branch
      %19 = sbr.rel (0) target = $region9
    $region8: #{tpu_custom_call.1} parent=1 // pred_region
      %20 = dma.done [#allocation3], 256
    $region9: #{tpu_custom_call.1} parent=1 // pred_fallthru
      _
    %v21 = vld [vmem:[#allocation2] sm:$0xff]
    %v22 = vld [vmem:[#allocation2 + $0x8] sm:$0xff]
    %v23 = vmul.f32 %v21, 0.5
    %v24 = vmul.f32 %v22, 0.5
    %25 = vst [vmem:[#allocation5] sm:$0xff] %v23
    %26 = vst [vmem:[#allocation5 + $0x8] sm:$0xff] %v24
    // Predicated region
    $region10: #{tpu_custom_call.1} parent=1 // pred_check
      _
    $region11: #{tpu_custom_call.1} parent=1 // pred_check_branch
      %28 = sbr.rel (0) target = $region13
    $region12: #{tpu_custom_call.1} parent=1 // pred_region
      %s30 = ssub.s32 256, 256
      %31 = vsyncadd [#allocation4], %s30
      %s33 = sshll.u32 [#allocation5], 4
      %s34 = int_to_ptr.vmem [resolvable:$true] %s33
      %36 = dma.vmem_to_hbm [thread:$0]  %s34, 256, %s1, [#allocation4]
    $region13: #{tpu_custom_call.1} parent=1 // pred_fallthru
      _
    // Predicated region
    $region14: #{tpu_custom_call.1} parent=1 // pred_check
      _
    $region15: #{tpu_custom_call.1} parent=1 // pred_check_branch
      %38 = sbr.rel (0) target = $region17
    $region16: #{tpu_custom_call.1} parent=1 // pred_region
      %39 = dma.done [#allocation4], 256
    $region17: #{tpu_custom_call.1} parent=1 // pred_fallthru
      _
    %40 = vsyncpa [#allocation3], 1
    %41 = vsyncpa [#allocation4], 1

</llo_original>
